<compile_context>
chip_gen: v5e
topology: v5e:2x2
jax: 0.10.0
libtpu: 0.0.40
codegen_flags: <defaults>
</compile_context>

<pallas_src>
import jax
import jax.numpy as jnp
from jax.experimental import pallas as pl
from jax.experimental.pallas import tpu as pltpu

CLIN_DIM = 64
IMG_DIM = 32
H1, H2, H3, OUT = 64, 32, 16, 3

BIAS_PAD = 128            # b1|b2|b3|b4 packed into one lane-dense row (115 used)
WPK_COLS = 64             # w2|w3|w4 packed into one (64, 64) buffer (51 cols used)


def _round_up(x, m):
    return ((x + m - 1) // m) * m


def _combiner_mlp_kernel(clin_ref, img_ref, w1c_ref, w1i_ref, wpk_ref, bias_ref,
                         o_ref):
    # Unpack the consolidated resident parameters (value-level static slices:
    # tiny vreg ops, once per grid step).
    b = bias_ref[...]                                   # (1, 128) f32
    b1 = b[:, 0:H1]
    b2 = b[:, H1:H1 + H2]
    b3 = b[:, H1 + H2:H1 + H2 + H3]
    b4 = b[:, H1 + H2 + H3:H1 + H2 + H3 + OUT]

    wpk = wpk_ref[...]                                  # (64, 64) bf16
    w2 = wpk[:, 0:H2]                                   # (64, 32)
    w3 = wpk[0:H2, H2:H2 + H3]                          # (32, 16)
    w4 = wpk[0:H3, H2 + H3:H2 + H3 + OUT]               # (16, 3)

    # In-kernel cast of the streamed f32 activations to bf16 right before the
    # MXU dots (both operands bf16 -> single-pass matmul; accumulate in f32).
    clin = clin_ref[...].astype(jnp.bfloat16)
    img = img_ref[...].astype(jnp.bfloat16)

    # fc1 on the (virtually) concatenated input: cat(c,i) @ W1 == c@W1c + i@W1i.
    h = (jnp.dot(clin, w1c_ref[...], preferred_element_type=jnp.float32)
         + jnp.dot(img, w1i_ref[...], preferred_element_type=jnp.float32)
         + b1)
    h = jnp.maximum(h, 0.0)
    # fc2 + ReLU
    h = jnp.maximum(
        jnp.dot(h.astype(jnp.bfloat16), w2, preferred_element_type=jnp.float32)
        + b2, 0.0)
    # fc3 + ReLU
    h = jnp.maximum(
        jnp.dot(h.astype(jnp.bfloat16), w3, preferred_element_type=jnp.float32)
        + b3, 0.0)
    # fc4 (no activation). Output stays (tile_b, 3) — writeback is ~3% of
    # input traffic, so the lane-sparse store is not worth widening.
    out = (jnp.dot(h.astype(jnp.bfloat16), w4, preferred_element_type=jnp.float32)
           + b4)
    o_ref[...] = out.astype(o_ref.dtype)


def pack_params(params):
    """Pack raw per-layer f32 params into the 4 kernel operands.

    Call ONCE at model init (outside the step function) and reuse the result
    for every forward call."""
    w1c, w1i, b1, w2, b2, w3, b3, w4, b4 = params

    bias = jnp.zeros((1, BIAS_PAD), jnp.float32)
    bias = bias.at[:, 0:H1].set(b1)
    bias = bias.at[:, H1:H1 + H2].set(b2)
    bias = bias.at[:, H1 + H2:H1 + H2 + H3].set(b3)
    bias = bias.at[:, H1 + H2 + H3:H1 + H2 + H3 + OUT].set(b4)

    wpk = jnp.zeros((H1, WPK_COLS), jnp.float32)
    wpk = wpk.at[:, 0:H2].set(w2)
    wpk = wpk.at[0:H2, H2:H2 + H3].set(w3)
    wpk = wpk.at[0:H3, H2 + H3:H2 + H3 + OUT].set(w4)

    return (w1c.astype(jnp.bfloat16), w1i.astype(jnp.bfloat16),
            wpk.astype(jnp.bfloat16), bias)


def _jax_forward_packed(clinical, image, packed):
    """Plain-JAX fallback for tiny batches.

    Uses the same packed bf16 params and f32 accumulation as the kernel so
    numerics do not change at the batch-size threshold."""
    w1c, w1i, wpk, bias = packed
    b1 = bias[:, 0:H1]
    b2 = bias[:, H1:H1 + H2]
    b3 = bias[:, H1 + H2:H1 + H2 + H3]
    b4 = bias[:, H1 + H2 + H3:H1 + H2 + H3 + OUT]
    w2 = wpk[:, 0:H2]
    w3 = wpk[0:H2, H2:H2 + H3]
    w4 = wpk[0:H3, H2 + H3:H2 + H3 + OUT]

    dot = lambda a, w: jnp.dot(a.astype(jnp.bfloat16), w,
                               preferred_element_type=jnp.float32)
    h = jax.nn.relu(dot(clinical, w1c) + dot(image, w1i) + b1)
    h = jax.nn.relu(dot(h, w2) + b2)
    h = jax.nn.relu(dot(h, w3) + b3)
    return dot(h, w4) + b4


def combiner_mlp(clinical, image, packed_params, *, tile_b=1024,
                 force_pallas=False):
    """clinical: (B, 64) f32, image: (B, 32) f32 -> (B, 3) f32.

    `packed_params` is the output of pack_params (computed once at init)."""
    B = clinical.shape[0]
    assert clinical.shape == (B, CLIN_DIM) and image.shape == (B, IMG_DIM)

    if B < 128 and not force_pallas:
        # Pallas fixed pipeline cost exceeds the work here.
        return _jax_forward_packed(clinical, image, packed_params)

    # Batch is the only MXU-fillable axis. Cap the tile so the grid always has
    # >= 2 steps (pipelining + both v7x TensorCores), round to a multiple of
    # 16 (safe for f32 and bf16 tiles alike).
    tile_b = min(tile_b, _round_up(pl.cdiv(B, 2), 16))
    tile_b = _round_up(tile_b, 16)
    grid = (pl.cdiv(B, tile_b),)

    w1c, w1i, wpk, bias = packed_params

    full = lambda i: (0, 0)   # parameters are resident for every batch tile
    in_specs = [
        # f32 activation streams (change every grid step); bf16 cast happens
        # inside the kernel so no extra wrapper-side HBM pass is needed.
        pl.BlockSpec((tile_b, CLIN_DIM), lambda i: (i, 0)),
        pl.BlockSpec((tile_b, IMG_DIM), lambda i: (i, 0)),
        # Resident parameters (constant block index -> no re-DMA per step).
        pl.BlockSpec((CLIN_DIM, H1), full),
        pl.BlockSpec((IMG_DIM, H1), full),
        pl.BlockSpec((H1, WPK_COLS), full),
        pl.BlockSpec((1, BIAS_PAD), full),
    ]
    out_specs = pl.BlockSpec((tile_b, OUT), lambda i: (i, 0))

    flops = 2 * B * (96 * H1 + H1 * H2 + H2 * H3 + H3 * OUT)
    bytes_accessed = (B * (CLIN_DIM + IMG_DIM) * 4          # f32 inputs
                      + B * OUT * 4                          # f32 output
                      + (CLIN_DIM * H1 + IMG_DIM * H1 + H1 * WPK_COLS) * 2
                      + BIAS_PAD * 4)                        # resident params

    return pl.pallas_call(
        _combiner_mlp_kernel,
        out_shape=jax.ShapeDtypeStruct((B, OUT), jnp.float32),
        grid_spec=pltpu.PrefetchScalarGridSpec(
            num_scalar_prefetch=0,
            grid=grid,
            in_specs=in_specs,
            out_specs=out_specs,
        ),
        compiler_params=pltpu.CompilerParams(
            dimension_semantics=("parallel",)),
        cost_estimate=pl.CostEstimate(flops=flops, transcendentals=0,
                                      bytes_accessed=bytes_accessed),
    )(clinical, image, w1c, w1i, wpk, bias)


def init_params(key):
    """Deterministic parameter init (PyTorch-Linear-style uniform bounds).

    Weights are stored as (in_features, out_features), i.e. already
    transposed relative to torch.nn.Linear.weight."""
    ks = jax.random.split(key, 8)

    def lin(kw, kb, fan_in, fan_out):
        bound = 1.0 / jnp.sqrt(fan_in)
        w = jax.random.uniform(kw, (fan_in, fan_out), jnp.float32, -bound, bound)
        b = jax.random.uniform(kb, (1, fan_out), jnp.float32, -bound, bound)
        return w, b

    w1, b1 = lin(ks[0], ks[1], CLIN_DIM + IMG_DIM, H1)   # fc1: 96 -> 64
    w2, b2 = lin(ks[2], ks[3], H1, H2)                   # fc2: 64 -> 32
    w3, b3 = lin(ks[4], ks[5], H2, H3)                   # fc3: 32 -> 16
    w4, b4 = lin(ks[6], ks[7], H3, OUT)                  # fc4: 16 -> 3

    # split fc1 weight into the clinical / image halves (concat axis = dim 1)
    w1c, w1i = w1[:CLIN_DIM], w1[CLIN_DIM:]
    return (w1c, w1i, b1, w2, b2, w3, b3, w4, b4)


def reference(clinical, image, params):
    """Reference that mirrors the kernel's bf16-input / f32-accumulate path.

    (If torch-f32 parity tighter than ~1e-2 is required, keep activations f32
    and cast only weights — documented tolerance is 1e-2 here.)"""
    w1c, w1i, b1, w2, b2, w3, b3, w4, b4 = params
    bf = lambda a: a.astype(jnp.bfloat16).astype(jnp.float32)
    h = jax.nn.relu(bf(clinical) @ bf(w1c) + bf(image) @ bf(w1i) + b1)
    h = jax.nn.relu(bf(h) @ bf(w2) + b2)
    h = jax.nn.relu(bf(h) @ bf(w3) + b3)
    return bf(h) @ bf(w4) + b4


if __name__ == "__main__":
    key = jax.random.PRNGKey(0)
    k_clin, k_img, k_params = jax.random.split(key, 3)

    # B=512 with the tile cap gives tile_b=256 and a 2-step "parallel" grid,
    # so the pipeline (and v7x's 2 TensorCores) is actually exercised.
    B = 512
    clinical = jax.random.normal(k_clin, (B, CLIN_DIM), jnp.float32)
    image = jax.random.normal(k_img, (B, IMG_DIM), jnp.float32)

    raw_params = init_params(k_params)
    packed = pack_params(raw_params)          # done ONCE, outside the step fn

    out = combiner_mlp(clinical, image, packed, force_pallas=True)
    out = jax.block_until_ready(out)

    ref = reference(clinical, image, raw_params)
    assert out.shape == (B, OUT)
    assert jnp.allclose(out, ref, atol=1e-2, rtol=1e-2), "mismatch vs reference"

    print("KERNEL_OK")
</pallas_src>

<mosaic_0001>
module attributes {stable_mosaic.version = 11 : i64} {
  func.func @_combiner_mlp_kernel(%arg0: i32, %arg1: memref<256x64xf32, #tpu.memory_space<vmem>>, %arg2: memref<256x32xf32, #tpu.memory_space<vmem>>, %arg3: memref<64x64xbf16, #tpu.memory_space<vmem>>, %arg4: memref<32x64xbf16, #tpu.memory_space<vmem>>, %arg5: memref<64x64xbf16, #tpu.memory_space<vmem>>, %arg6: memref<1x128xf32, #tpu.memory_space<vmem>>, %arg7: memref<256x3xf32, #tpu.memory_space<vmem>>) attributes {dimension_semantics = [#tpu.dimension_semantics<parallel>], iteration_bounds = array<i64: 2>, scalar_prefetch = 0 : i64, scratch_operands = 0 : i64, tpu.core_type = #tpu.core_type<tc>, window_params = [{transform_indices = @transform_0, window_bounds = array<i64: 256, 64>}, {transform_indices = @transform_1, window_bounds = array<i64: 256, 32>}, {pipeline_mode = #tpu.pipeline_mode<synchronous>, transform_indices = @transform_2, window_bounds = array<i64: 64, 64>}, {pipeline_mode = #tpu.pipeline_mode<synchronous>, transform_indices = @transform_3, window_bounds = array<i64: 32, 64>}, {pipeline_mode = #tpu.pipeline_mode<synchronous>, transform_indices = @transform_4, window_bounds = array<i64: 64, 64>}, {pipeline_mode = #tpu.pipeline_mode<synchronous>, transform_indices = @transform_5, window_bounds = array<i64: 1, 128>}, {transform_indices = @transform_6, window_bounds = array<i64: 256, 3>}]} {
    %c0 = arith.constant 0 : index
    %c0_0 = arith.constant 0 : index
    %0 = vector.load %arg6[%c0, %c0_0] : memref<1x128xf32, #tpu.memory_space<vmem>>, vector<1x128xf32>
    %1 = vector.extract_strided_slice %0 {offsets = [0, 0], sizes = [1, 64], strides = [1, 1]} : vector<1x128xf32> to vector<1x64xf32>
    %2 = vector.extract_strided_slice %0 {offsets = [0, 64], sizes = [1, 32], strides = [1, 1]} : vector<1x128xf32> to vector<1x32xf32>
    %3 = vector.extract_strided_slice %0 {offsets = [0, 96], sizes = [1, 16], strides = [1, 1]} : vector<1x128xf32> to vector<1x16xf32>
    %4 = vector.extract_strided_slice %0 {offsets = [0, 112], sizes = [1, 3], strides = [1, 1]} : vector<1x128xf32> to vector<1x3xf32>
    %c0_1 = arith.constant 0 : index
    %c0_2 = arith.constant 0 : index
    %5 = vector.load %arg5[%c0_1, %c0_2] : memref<64x64xbf16, #tpu.memory_space<vmem>>, vector<64x64xbf16>
    %6 = vector.extract_strided_slice %5 {offsets = [0, 0], sizes = [64, 32], strides = [1, 1]} : vector<64x64xbf16> to vector<64x32xbf16>
    %7 = vector.extract_strided_slice %5 {offsets = [0, 32], sizes = [32, 16], strides = [1, 1]} : vector<64x64xbf16> to vector<32x16xbf16>
    %8 = vector.extract_strided_slice %5 {offsets = [0, 48], sizes = [16, 3], strides = [1, 1]} : vector<64x64xbf16> to vector<16x3xbf16>
    %c0_3 = arith.constant 0 : index
    %c0_4 = arith.constant 0 : index
    %9 = vector.load %arg1[%c0_3, %c0_4] : memref<256x64xf32, #tpu.memory_space<vmem>>, vector<256x64xf32>
    %10 = arith.truncf %9 : vector<256x64xf32> to vector<256x64xbf16>
    %c0_5 = arith.constant 0 : index
    %c0_6 = arith.constant 0 : index
    %11 = vector.load %arg2[%c0_5, %c0_6] : memref<256x32xf32, #tpu.memory_space<vmem>>, vector<256x32xf32>
    %12 = arith.truncf %11 : vector<256x32xf32> to vector<256x32xbf16>
    %c0_7 = arith.constant 0 : index
    %c0_8 = arith.constant 0 : index
    %13 = vector.load %arg3[%c0_7, %c0_8] : memref<64x64xbf16, #tpu.memory_space<vmem>>, vector<64x64xbf16>
    %cst = arith.constant dense<0.000000e+00> : vector<256x64xf32>
    %14 = tpu.matmul %10, %13, %cst {dimension_numbers = #tpu.dot_dimension_numbers<[1], [0], [0], [1], [0, 0, 1, 1], [], []>} : vector<256x64xbf16>, vector<64x64xbf16>, vector<256x64xf32> -> vector<256x64xf32>
    %c0_9 = arith.constant 0 : index
    %c0_10 = arith.constant 0 : index
    %15 = vector.load %arg4[%c0_9, %c0_10] : memref<32x64xbf16, #tpu.memory_space<vmem>>, vector<32x64xbf16>
    %cst_11 = arith.constant dense<0.000000e+00> : vector<256x64xf32>
    %16 = tpu.matmul %12, %15, %cst_11 {dimension_numbers = #tpu.dot_dimension_numbers<[1], [0], [0], [1], [0, 0, 1, 1], [], []>} : vector<256x32xbf16>, vector<32x64xbf16>, vector<256x64xf32> -> vector<256x64xf32>
    %17 = arith.addf %14, %16 : vector<256x64xf32>
    %18 = vector.broadcast %1 : vector<1x64xf32> to vector<256x64xf32>
    %19 = arith.addf %17, %18 : vector<256x64xf32>
    %cst_12 = arith.constant 0.000000e+00 : f32
    %20 = vector.broadcast %cst_12 : f32 to vector<256x64xf32>
    %21 = arith.maximumf %19, %20 : vector<256x64xf32>
    %22 = arith.truncf %21 : vector<256x64xf32> to vector<256x64xbf16>
    %cst_13 = arith.constant dense<0.000000e+00> : vector<256x32xf32>
    %23 = tpu.matmul %22, %6, %cst_13 {dimension_numbers = #tpu.dot_dimension_numbers<[1], [0], [0], [1], [0, 0, 1, 1], [], []>} : vector<256x64xbf16>, vector<64x32xbf16>, vector<256x32xf32> -> vector<256x32xf32>
    %24 = vector.broadcast %2 : vector<1x32xf32> to vector<256x32xf32>
    %25 = arith.addf %23, %24 : vector<256x32xf32>
    %cst_14 = arith.constant 0.000000e+00 : f32
    %26 = vector.broadcast %cst_14 : f32 to vector<256x32xf32>
    %27 = arith.maximumf %25, %26 : vector<256x32xf32>
    %28 = arith.truncf %27 : vector<256x32xf32> to vector<256x32xbf16>
    %cst_15 = arith.constant dense<0.000000e+00> : vector<256x16xf32>
    %29 = tpu.matmul %28, %7, %cst_15 {dimension_numbers = #tpu.dot_dimension_numbers<[1], [0], [0], [1], [0, 0, 1, 1], [], []>} : vector<256x32xbf16>, vector<32x16xbf16>, vector<256x16xf32> -> vector<256x16xf32>
    %30 = vector.broadcast %3 : vector<1x16xf32> to vector<256x16xf32>
    %31 = arith.addf %29, %30 : vector<256x16xf32>
    %cst_16 = arith.constant 0.000000e+00 : f32
    %32 = vector.broadcast %cst_16 : f32 to vector<256x16xf32>
    %33 = arith.maximumf %31, %32 : vector<256x16xf32>
    %34 = arith.truncf %33 : vector<256x16xf32> to vector<256x16xbf16>
    %cst_17 = arith.constant dense<0.000000e+00> : vector<256x3xf32>
    %35 = tpu.matmul %34, %8, %cst_17 {dimension_numbers = #tpu.dot_dimension_numbers<[1], [0], [0], [1], [0, 0, 1, 1], [], []>} : vector<256x16xbf16>, vector<16x3xbf16>, vector<256x3xf32> -> vector<256x3xf32>
    %36 = vector.broadcast %4 : vector<1x3xf32> to vector<256x3xf32>
    %37 = arith.addf %35, %36 : vector<256x3xf32>
    %c0_18 = arith.constant 0 : index
    %c0_19 = arith.constant 0 : index
    %38 = vector.load %arg7[%c0_18, %c0_19] : memref<256x3xf32, #tpu.memory_space<vmem>>, vector<256x3xf32>
    tpu.vector_store %arg7[%c0_18, %c0_19], %37 {strides = array<i32>} : memref<256x3xf32, #tpu.memory_space<vmem>>, vector<256x3xf32>,
    return
  }
  func.func @transform_0(%arg0: i32) -> (i32, i32) {
    %c0_i32 = arith.constant 0 : i32
    %c0_i32_0 = arith.constant 0 : i32
    return %arg0, %c0_i32 : i32, i32
  }
  func.func @transform_1(%arg0: i32) -> (i32, i32) {
    %c0_i32 = arith.constant 0 : i32
    %c0_i32_0 = arith.constant 0 : i32
    return %arg0, %c0_i32 : i32, i32
  }
  func.func @transform_2(%arg0: i32) -> (i32, i32) {
    %c0_i32 = arith.constant 0 : i32
    %c0_i32_0 = arith.constant 0 : i32
    %c0_i32_1 = arith.constant 0 : i32
    return %c0_i32, %c0_i32_0 : i32, i32
  }
  func.func @transform_3(%arg0: i32) -> (i32, i32) {
    %c0_i32 = arith.constant 0 : i32
    %c0_i32_0 = arith.constant 0 : i32
    %c0_i32_1 = arith.constant 0 : i32
    return %c0_i32, %c0_i32_0 : i32, i32
  }
  func.func @transform_4(%arg0: i32) -> (i32, i32) {
    %c0_i32 = arith.constant 0 : i32
    %c0_i32_0 = arith.constant 0 : i32
    %c0_i32_1 = arith.constant 0 : i32
    return %c0_i32, %c0_i32_0 : i32, i32
  }
  func.func @transform_5(%arg0: i32) -> (i32, i32) {
    %c0_i32 = arith.constant 0 : i32
    %c0_i32_0 = arith.constant 0 : i32
    %c0_i32_1 = arith.constant 0 : i32
    return %c0_i32, %c0_i32_0 : i32, i32
  }
  func.func @transform_6(%arg0: i32) -> (i32, i32) {
    %c0_i32 = arith.constant 0 : i32
    %c0_i32_0 = arith.constant 0 : i32
    return %arg0, %c0_i32 : i32, i32
  }
}

</mosaic_0001>

<llo_original>
// kernel: tpu_custom_call.1
$region0: #{tpu_custom_call.1}
  #allocation0 [shape = 'u32[]', space=smem, size = 0x4, offset = 0x4, fixed_abs, tag = 'smem constant byte address 0x4 - core index']
  #allocation1 [shape = 'u32[72,128]{1,0:T(1,128)}', space=vmem, size = 0x9000, scoped, tag = 'internal scratch']
  %s0 = inlined_call_operand.vmem [shape: f32[512,64], index: 0, kind: input, shape index: {}]
  %s1 = inlined_call_operand.vmem [shape: f32[512,32], index: 1, kind: input, shape index: {}]
  %s2 = inlined_call_operand.vmem [shape: bf16[64,64], index: 2, kind: input, shape index: {}]
  %s3 = inlined_call_operand.vmem [shape: bf16[32,64], index: 3, kind: input, shape index: {}]
  %s4 = inlined_call_operand.vmem [shape: bf16[64,64], index: 4, kind: input, shape index: {}]
  %s5 = inlined_call_operand.vmem [shape: f32[1,128], index: 5, kind: input, shape index: {}]
  %s6 = inlined_call_operand.vmem [shape: f32[512,3], index: 6, kind: output, shape index: {}]
  %s7 = sld [smem:[#allocation0]]
  $region57: #{tpu_custom_call.1} parent=0
    _
  %s9 = ssub.s32 1, %s7
  %s10 = scalar_select 0, %s9, %s7
  loop: start=0, step=1, limit=4
  $region2: #{tpu_custom_call.1} parent=0 // loop_pre_header
    _
  $region3: #{tpu_custom_call.1} parent=0 // loop_header
    %s12 = sphi 0, %s16
    %p13 = scmp.ge.s32.totalorder %s12, 4
    %s22 = sphi 0, %s24
    %s25 = sphi 0, %s22
    %s26 = sphi 0, %s25
    %s42 = sphi 0, %s26
    %s48 = sphi 0, %s50
    %s51 = sphi 0, %s48
    %s52 = sphi 0, %s51
    %s68 = sphi 0, %s52
    %s72 = sphi 0, %s72
    %s74 = sphi 0, %s72
    %s75 = sphi 0, %s74
    %s89 = sphi 0, %s75
    %s93 = sphi 0, %s93
    %s95 = sphi 0, %s93
    %s96 = sphi 0, %s95
    %s110 = sphi 0, %s96
    %s114 = sphi 0, %s114
    %s116 = sphi 0, %s114
    %s117 = sphi 0, %s116
    %s131 = sphi 0, %s117
    %s135 = sphi 0, %s135
    %s137 = sphi 0, %s135
    %s138 = sphi 0, %s137
    %s152 = sphi 0, %s138
    %s158 = sphi 0, %s160
    %s161 = sphi 0, %s158
    %s162 = sphi 0, %s161
    %s178 = sphi 0, %s162
  $region4: #{tpu_custom_call.1} parent=0 // loop_header_branch
    %15 = sbr.rel (%p13) target = $region8
  $region5: #{tpu_custom_call.1} parent=0 // loop_body
    %s17 = ssub.s32 %s12, 1
    %s18 = ssub.s32 %s12, 2
    %s19 = sadd.s32 %s12, 1
    %s20 = ssub.s32 %s12, %s19
    %p21 = scmp.eq.s32.totalorder %s20, 0
    %s23 = sadd.s32 %s22, 1
    %s24 = scalar_select %p21, %s22, %s23
    %p27 = pneg %p21
    %p28 = scmp.eq.s32.totalorder %s12, 1
    %p29 = por %p27, %p28
    %p30 = scmp.ne.s32.totalorder %s22, %s25
    %p31 = scmp.eq.s32.totalorder %s12, 0
    %p32 = por %p30, %p31
    %p33 = scmp.ne.s32.totalorder %s22, %s25
    %p34 = scmp.eq.s32.totalorder %s17, 1
    %p35 = por %p33, %p34
    %p36 = scmp.ne.s32.totalorder %s25, %s26
    %p37 = scmp.eq.s32.totalorder %s17, 0
    %p38 = por %p36, %p37
    %p39 = scmp.ne.s32.totalorder %s25, %s26
    %p40 = scmp.eq.s32.totalorder %s18, 1
    %p41 = por %p39, %p40
    %p43 = scmp.ne.s32.totalorder %s26, %s42
    %p44 = scmp.eq.s32.totalorder %s18, 0
    %p45 = por %p43, %p44
    %s46 = ssub.s32 %s12, %s19
    %p47 = scmp.eq.s32.totalorder %s46, 0
    %s49 = sadd.s32 %s48, 1
    %s50 = scalar_select %p47, %s48, %s49
    %p53 = pneg %p47
    %p54 = scmp.eq.s32.totalorder %s12, 1
    %p55 = por %p53, %p54
    %p56 = scmp.ne.s32.totalorder %s48, %s51
    %p57 = scmp.eq.s32.totalorder %s12, 0
    %p58 = por %p56, %p57
    %p59 = scmp.ne.s32.totalorder %s48, %s51
    %p60 = scmp.eq.s32.totalorder %s17, 1
    %p61 = por %p59, %p60
    %p62 = scmp.ne.s32.totalorder %s51, %s52
    %p63 = scmp.eq.s32.totalorder %s17, 0
    %p64 = por %p62, %p63
    %p65 = scmp.ne.s32.totalorder %s51, %s52
    %p66 = scmp.eq.s32.totalorder %s18, 1
    %p67 = por %p65, %p66
    %p69 = scmp.ne.s32.totalorder %s52, %s68
    %p70 = scmp.eq.s32.totalorder %s18, 0
    %p71 = por %p69, %p70
    %s73 = sadd.s32 %s72, 1
    %p76 = scmp.eq.s32.totalorder %s12, 1
    %p77 = scmp.ne.s32.totalorder %s72, %s74
    %p78 = scmp.eq.s32.totalorder %s12, 0
    %p79 = por %p77, %p78
    %p80 = scmp.ne.s32.totalorder %s72, %s74
    %p81 = scmp.eq.s32.totalorder %s17, 1
    %p82 = por %p80, %p81
    %p83 = scmp.ne.s32.totalorder %s74, %s75
    %p84 = scmp.eq.s32.totalorder %s17, 0
    %p85 = por %p83, %p84
    %p86 = scmp.ne.s32.totalorder %s74, %s75
    %p87 = scmp.eq.s32.totalorder %s18, 1
    %p88 = por %p86, %p87
    %p90 = scmp.ne.s32.totalorder %s75, %s89
    %p91 = scmp.eq.s32.totalorder %s18, 0
    %p92 = por %p90, %p91
    %s94 = sadd.s32 %s93, 1
    %p97 = scmp.eq.s32.totalorder %s12, 1
    %p98 = scmp.ne.s32.totalorder %s93, %s95
    %p99 = scmp.eq.s32.totalorder %s12, 0
    %p100 = por %p98, %p99
    %p101 = scmp.ne.s32.totalorder %s93, %s95
    %p102 = scmp.eq.s32.totalorder %s17, 1
    %p103 = por %p101, %p102
    %p104 = scmp.ne.s32.totalorder %s95, %s96
    %p105 = scmp.eq.s32.totalorder %s17, 0
    %p106 = por %p104, %p105
    %p107 = scmp.ne.s32.totalorder %s95, %s96
    %p108 = scmp.eq.s32.totalorder %s18, 1
    %p109 = por %p107, %p108
    %p111 = scmp.ne.s32.totalorder %s96, %s110
    %p112 = scmp.eq.s32.totalorder %s18, 0
    %p113 = por %p111, %p112
    %s115 = sadd.s32 %s114, 1
    %p118 = scmp.eq.s32.totalorder %s12, 1
    %p119 = scmp.ne.s32.totalorder %s114, %s116
    %p120 = scmp.eq.s32.totalorder %s12, 0
    %p121 = por %p119, %p120
    %p122 = scmp.ne.s32.totalorder %s114, %s116
    %p123 = scmp.eq.s32.totalorder %s17, 1
    %p124 = por %p122, %p123
    %p125 = scmp.ne.s32.totalorder %s116, %s117
    %p126 = scmp.eq.s32.totalorder %s17, 0
    %p127 = por %p125, %p126
    %p128 = scmp.ne.s32.totalorder %s116, %s117
    %p129 = scmp.eq.s32.totalorder %s18, 1
    %p130 = por %p128, %p129
    %p132 = scmp.ne.s32.totalorder %s117, %s131
    %p133 = scmp.eq.s32.totalorder %s18, 0
    %p134 = por %p132, %p133
    %s136 = sadd.s32 %s135, 1
    %p139 = scmp.eq.s32.totalorder %s12, 1
    %p140 = scmp.ne.s32.totalorder %s135, %s137
    %p141 = scmp.eq.s32.totalorder %s12, 0
    %p142 = por %p140, %p141
    %p143 = scmp.ne.s32.totalorder %s135, %s137
    %p144 = scmp.eq.s32.totalorder %s17, 1
    %p145 = por %p143, %p144
    %p146 = scmp.ne.s32.totalorder %s137, %s138
    %p147 = scmp.eq.s32.totalorder %s17, 0
    %p148 = por %p146, %p147
    %p149 = scmp.ne.s32.totalorder %s137, %s138
    %p150 = scmp.eq.s32.totalorder %s18, 1
    %p151 = por %p149, %p150
    %p153 = scmp.ne.s32.totalorder %s138, %s152
    %p154 = scmp.eq.s32.totalorder %s18, 0
    %p155 = por %p153, %p154
    %s156 = ssub.s32 %s12, %s19
    %p157 = scmp.eq.s32.totalorder %s156, 0
    %s159 = sadd.s32 %s158, 1
    %s160 = scalar_select %p157, %s158, %s159
    %p163 = pneg %p157
    %p164 = scmp.eq.s32.totalorder %s12, 1
    %p165 = por %p163, %p164
    %p166 = scmp.ne.s32.totalorder %s158, %s161
    %p167 = scmp.eq.s32.totalorder %s12, 0
    %p168 = por %p166, %p167
    %p169 = scmp.ne.s32.totalorder %s158, %s161
    %p170 = scmp.eq.s32.totalorder %s17, 1
    %p171 = por %p169, %p170
    %p172 = scmp.ne.s32.totalorder %s161, %s162
    %p173 = scmp.eq.s32.totalorder %s17, 0
    %p174 = por %p172, %p173
    %p175 = scmp.ne.s32.totalorder %s161, %s162
    %p176 = scmp.eq.s32.totalorder %s18, 1
    %p177 = por %p175, %p176
    %p179 = scmp.ne.s32.totalorder %s162, %s178
    %p180 = scmp.eq.s32.totalorder %s18, 0
    %p181 = por %p179, %p180
    %p182 = scmp.le.s32.totalorder 1, %s12
    %p183 = scmp.lt.s32.totalorder %s12, 3
    %p184 = pnand %p182, %p183
    %p185 = pneg %p184
    // Predicated region
    $region9: #{tpu_custom_call.1} parent=5 // pred_check
      _
    $region10: #{tpu_custom_call.1} parent=5 // pred_check_branch
      %187 = sbr.rel (%p184) target = $region12
    $region11: #{tpu_custom_call.1} parent=5 // pred_region
      %s188 = ssub.s32 %s12, 1
      // Predicated region
      $region13: #{tpu_custom_call.1} parent=11 // pred_check
        %p189 = pneg %p85
      $region14: #{tpu_custom_call.1} parent=11 // pred_check_branch
        %191 = sbr.rel (%p189) target = $region16
      $region15: #{tpu_custom_call.1} parent=11 // pred_region
        _
      $region16: #{tpu_custom_call.1} parent=11 // pred_fallthru
        _
      // Predicated region
      $region17: #{tpu_custom_call.1} parent=11 // pred_check
        %p192 = pneg %p106
      $region18: #{tpu_custom_call.1} parent=11 // pred_check_branch
        %194 = sbr.rel (%p192) target = $region20
      $region19: #{tpu_custom_call.1} parent=11 // pred_region
        _
      $region20: #{tpu_custom_call.1} parent=11 // pred_fallthru
        _
      // Predicated region
      $region21: #{tpu_custom_call.1} parent=11 // pred_check
        %p195 = pneg %p127
      $region22: #{tpu_custom_call.1} parent=11 // pred_check_branch
        %197 = sbr.rel (%p195) target = $region24
      $region23: #{tpu_custom_call.1} parent=11 // pred_region
        _
      $region24: #{tpu_custom_call.1} parent=11 // pred_fallthru
        _
      // Predicated region
      $region25: #{tpu_custom_call.1} parent=11 // pred_check
        %p198 = pneg %p148
      $region26: #{tpu_custom_call.1} parent=11 // pred_check_branch
        %200 = sbr.rel (%p198) target = $region28
      $region27: #{tpu_custom_call.1} parent=11 // pred_region
        _
      $region28: #{tpu_custom_call.1} parent=11 // pred_fallthru
        _
    $region12: #{tpu_custom_call.1} parent=5 // pred_fallthru
      _
    %p201 = scmp.lt.s32.totalorder %s12, 2
    // Predicated region
    $region29: #{tpu_custom_call.1} parent=5 // pred_check
      %p202 = pneg %p201
    $region30: #{tpu_custom_call.1} parent=5 // pred_check_branch
      %204 = sbr.rel (%p202) target = $region32
    $region31: #{tpu_custom_call.1} parent=5 // pred_region
      // Predicated region
      $region33: #{tpu_custom_call.1} parent=31 // pred_check
        %p205 = pneg %p32
      $region34: #{tpu_custom_call.1} parent=31 // pred_check_branch
        %207 = sbr.rel (%p205) target = $region36
      $region35: #{tpu_custom_call.1} parent=31 // pred_region
        %s208 = smul.u32 32, %s12
        %p209 = scmp.lt.s32.totalorder %s208, 63
        %s210 = scalar_select %p209, %s208, 63
        %s211 = smul.addr %s210, 8
        %s212 = scalar_lea.vmem %s0, %s211
        %s213 = smul.u32 32, %s12
      $region36: #{tpu_custom_call.1} parent=31 // pred_fallthru
        _
      // Predicated region
      $region37: #{tpu_custom_call.1} parent=31 // pred_check
        %p214 = pneg %p58
      $region38: #{tpu_custom_call.1} parent=31 // pred_check_branch
        %216 = sbr.rel (%p214) target = $region40
      $region39: #{tpu_custom_call.1} parent=31 // pred_region
        %s217 = smul.u32 32, %s12
        %p218 = scmp.lt.s32.totalorder %s217, 63
        %s219 = scalar_select %p218, %s217, 63
        %s220 = smul.addr %s219, 8
        %s221 = scalar_lea.vmem %s1, %s220
        %s222 = smul.u32 32, %s12
      $region40: #{tpu_custom_call.1} parent=31 // pred_fallthru
        _
    $region32: #{tpu_custom_call.1} parent=5 // pred_fallthru
      _
    %p223 = scmp.le.s32.totalorder 1, %s12
    %p224 = scmp.lt.s32.totalorder %s12, 3
    %p225 = pnand %p223, %p224
    %p226 = pneg %p225
    // Predicated region
    $region41: #{tpu_custom_call.1} parent=5 // pred_check
      _
    $region42: #{tpu_custom_call.1} parent=5 // pred_check_branch
      %228 = sbr.rel (%p225) target = $region44
    $region43: #{tpu_custom_call.1} parent=5 // pred_region
      %s229 = ssub.s32 %s12, 1
      %s230 = smul.u32 32, %s17
      %p231 = scmp.lt.s32.totalorder %s230, 63
      %s232 = scalar_select %p231, %s230, 63
      %s233 = smul.addr %s232, 8
      %s234 = scalar_lea.vmem %s0, %s233
      %p235 = pneg %p38
      %p236 = pneg %p35
      %s237 = smul.u32 32, %s17
      %p238 = scmp.lt.s32.totalorder %s237, 63
      %s239 = scalar_select %p238, %s237, 63
      %s240 = smul.addr %s239, 8
      %s241 = scalar_lea.vmem %s1, %s240
      %p242 = pneg %p64
      %p243 = pneg %p61
      %p244 = pneg %p85
      %p245 = pneg %p82
      %p246 = pneg %p106
      %p247 = pneg %p103
      %p248 = pneg %p127
      %p249 = pneg %p124
      %p250 = pneg %p148
      %p251 = pneg %p145
      %p252 = pneg %p174
      %p253 = pneg %p171
      %s254 = smul.u32 32, %s17
      %p255 = scmp.lt.s32.totalorder %s254, 63
      %s256 = scalar_select %p255, %s254, 63
      %s257 = smul.addr %s256, 8
      %s258 = scalar_lea.vmem %s6, %s257
      %s259 = smul.u32 32, %s17
      %p260 = scmp.lt.s32.totalorder %s259, 63
      %s261 = scalar_select %p260, %s259, 63
      %s262 = smul.addr %s261, 8
      %s263 = scalar_lea.vmem %s0, %s262
      %s264 = smul.u32 32, %s17
      %s265 = smul.u32 32, %s17
      %p266 = scmp.lt.s32.totalorder %s265, 63
      %s267 = scalar_select %p266, %s265, 63
      %s268 = smul.addr %s267, 8
      %s269 = scalar_lea.vmem %s1, %s268
      %s270 = smul.u32 32, %s17
      %s271 = smul.u32 32, %s17
      %p272 = scmp.lt.s32.totalorder %s271, 63
      %s273 = scalar_select %p272, %s271, 63
      %s274 = smul.addr %s273, 8
      %s275 = scalar_lea.vmem %s6, %s274
      %s276 = smul.u32 32, %s17
      %v278 = vld [vmem:[%s5] sm:$0x1]
      %v279 = vld [vmem:[%s4] sm:$0xf]
      %v280 = vld [vmem:[%s4 + $0x4] sm:$0xf]
      %v281 = vld [vmem:[%s4 + $0x8] sm:$0xf]
      %v282 = vld [vmem:[%s4 + $0xc] sm:$0xf]
      %v283 = vld [vmem:[%s4 + $0x10] sm:$0xf]
      %v284 = vld [vmem:[%s4 + $0x14] sm:$0xf]
      %v285 = vld [vmem:[%s4 + $0x18] sm:$0xf]
      %v286 = vld [vmem:[%s4 + $0x1c] sm:$0xf]
      %v287 = vld [vmem:[%s263] sm:$0xff]
      %v288 = vld [vmem:[%s263 + $0x8] sm:$0xff]
      %v289 = vld [vmem:[%s263 + $0x10] sm:$0xff]
      %v290 = vld [vmem:[%s263 + $0x18] sm:$0xff]
      %v291 = vld [vmem:[%s263 + $0x20] sm:$0xff]
      %v292 = vld [vmem:[%s263 + $0x28] sm:$0xff]
      %v293 = vld [vmem:[%s263 + $0x30] sm:$0xff]
      %v294 = vld [vmem:[%s263 + $0x38] sm:$0xff]
      %v295 = vld [vmem:[%s263 + $0x40] sm:$0xff]
      %v296 = vld [vmem:[%s263 + $0x48] sm:$0xff]
      %v297 = vld [vmem:[%s263 + $0x50] sm:$0xff]
      %v298 = vld [vmem:[%s263 + $0x58] sm:$0xff]
      %v299 = vld [vmem:[%s263 + $0x60] sm:$0xff]
      %v300 = vld [vmem:[%s263 + $0x68] sm:$0xff]
      %v301 = vld [vmem:[%s263 + $0x70] sm:$0xff]
      %v302 = vld [vmem:[%s263 + $0x78] sm:$0xff]
      %v303 = vld [vmem:[%s263 + $0x80] sm:$0xff]
      %v304 = vld [vmem:[%s263 + $0x88] sm:$0xff]
      %v305 = vld [vmem:[%s263 + $0x90] sm:$0xff]
      %v306 = vld [vmem:[%s263 + $0x98] sm:$0xff]
      %v307 = vld [vmem:[%s263 + $0xa0] sm:$0xff]
      %v308 = vld [vmem:[%s263 + $0xa8] sm:$0xff]
      %v309 = vld [vmem:[%s263 + $0xb0] sm:$0xff]
      %v310 = vld [vmem:[%s263 + $0xb8] sm:$0xff]
      %v311 = vld [vmem:[%s263 + $0xc0] sm:$0xff]
      %v312 = vld [vmem:[%s263 + $0xc8] sm:$0xff]
      %v313 = vld [vmem:[%s263 + $0xd0] sm:$0xff]
      %v314 = vld [vmem:[%s263 + $0xd8] sm:$0xff]
      %v315 = vld [vmem:[%s263 + $0xe0] sm:$0xff]
      %v316 = vld [vmem:[%s263 + $0xe8] sm:$0xff]
      %v317 = vld [vmem:[%s263 + $0xf0] sm:$0xff]
      %v318 = vld [vmem:[%s263 + $0xf8] sm:$0xff]
      %v319 = vpack.c.bf16 %v288, %v287
      %v320 = vpack.c.bf16 %v290, %v289
      %v321 = vpack.c.bf16 %v292, %v291
      %v322 = vpack.c.bf16 %v294, %v293
      %v323 = vpack.c.bf16 %v296, %v295
      %v324 = vpack.c.bf16 %v298, %v297
      %v325 = vpack.c.bf16 %v300, %v299
      %v326 = vpack.c.bf16 %v302, %v301
      %v327 = vpack.c.bf16 %v304, %v303
      %v328 = vpack.c.bf16 %v306, %v305
      %v329 = vpack.c.bf16 %v308, %v307
      %v330 = vpack.c.bf16 %v310, %v309
      %v331 = vpack.c.bf16 %v312, %v311
      %v332 = vpack.c.bf16 %v314, %v313
      %v333 = vpack.c.bf16 %v316, %v315
      %v334 = vpack.c.bf16 %v318, %v317
      %v335 = vld [vmem:[%s269] sm:$0xff]
      %v336 = vld [vmem:[%s269 + $0x8] sm:$0xff]
      %v337 = vld [vmem:[%s269 + $0x10] sm:$0xff]
      %v338 = vld [vmem:[%s269 + $0x18] sm:$0xff]
      %v339 = vld [vmem:[%s269 + $0x20] sm:$0xff]
      %v340 = vld [vmem:[%s269 + $0x28] sm:$0xff]
      %v341 = vld [vmem:[%s269 + $0x30] sm:$0xff]
      %v342 = vld [vmem:[%s269 + $0x38] sm:$0xff]
      %v343 = vld [vmem:[%s269 + $0x40] sm:$0xff]
      %v344 = vld [vmem:[%s269 + $0x48] sm:$0xff]
      %v345 = vld [vmem:[%s269 + $0x50] sm:$0xff]
      %v346 = vld [vmem:[%s269 + $0x58] sm:$0xff]
      %v347 = vld [vmem:[%s269 + $0x60] sm:$0xff]
      %v348 = vld [vmem:[%s269 + $0x68] sm:$0xff]
      %v349 = vld [vmem:[%s269 + $0x70] sm:$0xff]
      %v350 = vld [vmem:[%s269 + $0x78] sm:$0xff]
      %v351 = vld [vmem:[%s269 + $0x80] sm:$0xff]
      %v352 = vld [vmem:[%s269 + $0x88] sm:$0xff]
      %v353 = vld [vmem:[%s269 + $0x90] sm:$0xff]
      %v354 = vld [vmem:[%s269 + $0x98] sm:$0xff]
      %v355 = vld [vmem:[%s269 + $0xa0] sm:$0xff]
      %v356 = vld [vmem:[%s269 + $0xa8] sm:$0xff]
      %v357 = vld [vmem:[%s269 + $0xb0] sm:$0xff]
      %v358 = vld [vmem:[%s269 + $0xb8] sm:$0xff]
      %v359 = vld [vmem:[%s269 + $0xc0] sm:$0xff]
      %v360 = vld [vmem:[%s269 + $0xc8] sm:$0xff]
      %v361 = vld [vmem:[%s269 + $0xd0] sm:$0xff]
      %v362 = vld [vmem:[%s269 + $0xd8] sm:$0xff]
      %v363 = vld [vmem:[%s269 + $0xe0] sm:$0xff]
      %v364 = vld [vmem:[%s269 + $0xe8] sm:$0xff]
      %v365 = vld [vmem:[%s269 + $0xf0] sm:$0xff]
      %v366 = vld [vmem:[%s269 + $0xf8] sm:$0xff]
      %v367 = vpack.c.bf16 %v336, %v335
      %v368 = vpack.c.bf16 %v338, %v337
      %v369 = vpack.c.bf16 %v340, %v339
      %v370 = vpack.c.bf16 %v342, %v341
      %v371 = vpack.c.bf16 %v344, %v343
      %v372 = vpack.c.bf16 %v346, %v345
      %v373 = vpack.c.bf16 %v348, %v347
      %v374 = vpack.c.bf16 %v350, %v349
      %v375 = vpack.c.bf16 %v352, %v351
      %v376 = vpack.c.bf16 %v354, %v353
      %v377 = vpack.c.bf16 %v356, %v355
      %v378 = vpack.c.bf16 %v358, %v357
      %v379 = vpack.c.bf16 %v360, %v359
      %v380 = vpack.c.bf16 %v362, %v361
      %v381 = vpack.c.bf16 %v364, %v363
      %v382 = vpack.c.bf16 %v366, %v365
      %v383 = vld [vmem:[%s2] sm:$0xf]
      %v384 = vld [vmem:[%s2 + $0x4] sm:$0xf]
      %v385 = vld [vmem:[%s2 + $0x8] sm:$0xf]
      %v386 = vld [vmem:[%s2 + $0xc] sm:$0xf]
      %v387 = vld [vmem:[%s2 + $0x10] sm:$0xf]
      %v388 = vld [vmem:[%s2 + $0x14] sm:$0xf]
      %v389 = vld [vmem:[%s2 + $0x18] sm:$0xf]
      %v390 = vld [vmem:[%s2 + $0x1c] sm:$0xf]
      %v391 = vld [vmem:[%s3] sm:$0xf]
      %v392 = vld [vmem:[%s3 + $0x4] sm:$0xf]
      %v393 = vld [vmem:[%s3 + $0x8] sm:$0xf]
      %v394 = vld [vmem:[%s3 + $0xc] sm:$0xf]
      %v399 = vunpack.c.l.b16 %v391
      %v400 = vunpack.c.l.b16 %v392
      %v401 = vunpack.c.l.b16 %v393
      %v402 = vunpack.c.l.b16 %v394
      %v403 = vpack.c.b16 %v400, %v399
      %v404 = vpack.c.b16 %v402, %v401
      %vm407 = vcmask 261120
      %v409 = vsel %vm407, %v367, 0
      %v412 = vsel %vm407, %v368, 0
      %v415 = vsel %vm407, %v369, 0
      %v418 = vsel %vm407, %v370, 0
      %v421 = vsel %vm407, %v371, 0
      %v424 = vsel %vm407, %v372, 0
      %v427 = vsel %vm407, %v373, 0
      %v430 = vsel %vm407, %v374, 0
      %v433 = vsel %vm407, %v375, 0
      %v436 = vsel %vm407, %v376, 0
      %v439 = vsel %vm407, %v377, 0
      %v442 = vsel %vm407, %v378, 0
      %v445 = vsel %vm407, %v379, 0
      %v448 = vsel %vm407, %v380, 0
      %v451 = vsel %vm407, %v381, 0
      %v454 = vsel %vm407, %v382, 0
      %456 = vmatpush.bf16.msra.mxu0 0
      %457 = vmatpush.bf16.msra.mxu0 0
      %458 = vmatpush.bf16.msra.mxu0 0
      %459 = vmatpush.bf16.msra.mxu0 0
      %460 = vmatpush.bf16.msra.mxu0 0
      %461 = vmatpush.bf16.msra.mxu0 0
      %462 = vmatpush.bf16.msra.mxu0 %v404
      %463 = vmatpush.bf16.msra.mxu0 %v403
      %464 = vmatmul.bf16.gmra.mxu0 %v409
      %v465 = vpop.f32.mrf.mxu0
      %v466 = vadd.f32 0.0, %v465
      %v467 = vpop.f32.mrf.mxu0
      %v468 = vadd.f32 0.0, %v467
      %469 = vmatmul.bf16.gmra.mxu0 %v412
      %v470 = vpop.f32.mrf.mxu0
      %v471 = vadd.f32 0.0, %v470
      %v472 = vpop.f32.mrf.mxu0
      %v473 = vadd.f32 0.0, %v472
      %474 = vmatmul.bf16.gmra.mxu0 %v415
      %v475 = vpop.f32.mrf.mxu0
      %v476 = vadd.f32 0.0, %v475
      %v477 = vpop.f32.mrf.mxu0
      %v478 = vadd.f32 0.0, %v477
      %479 = vmatmul.bf16.gmra.mxu0 %v418
      %v480 = vpop.f32.mrf.mxu0
      %v481 = vadd.f32 0.0, %v480
      %v482 = vpop.f32.mrf.mxu0
      %v483 = vadd.f32 0.0, %v482
      %484 = vmatmul.bf16.gmra.mxu0 %v421
      %v485 = vpop.f32.mrf.mxu0
      %v486 = vadd.f32 0.0, %v485
      %v487 = vpop.f32.mrf.mxu0
      %v488 = vadd.f32 0.0, %v487
      %489 = vmatmul.bf16.gmra.mxu0 %v424
      %v490 = vpop.f32.mrf.mxu0
      %v491 = vadd.f32 0.0, %v490
      %v492 = vpop.f32.mrf.mxu0
      %v493 = vadd.f32 0.0, %v492
      %494 = vmatmul.bf16.gmra.mxu0 %v427
      %v495 = vpop.f32.mrf.mxu0
      %v496 = vadd.f32 0.0, %v495
      %v497 = vpop.f32.mrf.mxu0
      %v498 = vadd.f32 0.0, %v497
      %499 = vmatmul.bf16.gmra.mxu0 %v430
      %v500 = vpop.f32.mrf.mxu0
      %v501 = vadd.f32 0.0, %v500
      %v502 = vpop.f32.mrf.mxu0
      %v503 = vadd.f32 0.0, %v502
      %504 = vmatmul.bf16.gmra.mxu0 %v433
      %v505 = vpop.f32.mrf.mxu0
      %v506 = vadd.f32 0.0, %v505
      %v507 = vpop.f32.mrf.mxu0
      %v508 = vadd.f32 0.0, %v507
      %509 = vmatmul.bf16.gmra.mxu0 %v436
      %v510 = vpop.f32.mrf.mxu0
      %v511 = vadd.f32 0.0, %v510
      %v512 = vpop.f32.mrf.mxu0
      %v513 = vadd.f32 0.0, %v512
      %514 = vmatmul.bf16.gmra.mxu0 %v439
      %v515 = vpop.f32.mrf.mxu0
      %v516 = vadd.f32 0.0, %v515
      %v517 = vpop.f32.mrf.mxu0
      %v518 = vadd.f32 0.0, %v517
      %519 = vmatmul.bf16.gmra.mxu0 %v442
      %v520 = vpop.f32.mrf.mxu0
      %v521 = vadd.f32 0.0, %v520
      %v522 = vpop.f32.mrf.mxu0
      %v523 = vadd.f32 0.0, %v522
      %524 = vmatmul.bf16.gmra.mxu0 %v445
      %v525 = vpop.f32.mrf.mxu0
      %v526 = vadd.f32 0.0, %v525
      %v527 = vpop.f32.mrf.mxu0
      %v528 = vadd.f32 0.0, %v527
      %529 = vmatmul.bf16.gmra.mxu0 %v448
      %v530 = vpop.f32.mrf.mxu0
      %v531 = vadd.f32 0.0, %v530
      %v532 = vpop.f32.mrf.mxu0
      %v533 = vadd.f32 0.0, %v532
      %534 = vmatmul.bf16.gmra.mxu0 %v451
      %v535 = vpop.f32.mrf.mxu0
      %v536 = vadd.f32 0.0, %v535
      %v537 = vpop.f32.mrf.mxu0
      %v538 = vadd.f32 0.0, %v537
      %539 = vmatmul.bf16.gmra.mxu0 %v454
      %v540 = vpop.f32.mrf.mxu0
      %v541 = vadd.f32 0.0, %v540
      %v542 = vpop.f32.mrf.mxu0
      %v543 = vadd.f32 0.0, %v542
      %544 = vdwg.mxu0
      %v553 = vunpack.c.l.b16 %v383
      %v554 = vunpack.c.l.b16 %v384
      %v555 = vunpack.c.l.b16 %v385
      %v556 = vunpack.c.l.b16 %v386
      %v557 = vunpack.c.l.b16 %v387
      %v558 = vunpack.c.l.b16 %v388
      %v559 = vunpack.c.l.b16 %v389
      %v560 = vunpack.c.l.b16 %v390
      %v561 = vpack.c.b16 %v554, %v553
      %v562 = vpack.c.b16 %v556, %v555
      %v563 = vpack.c.b16 %v558, %v557
      %v564 = vpack.c.b16 %v560, %v559
      %vm569 = vcmask 523264
      %v571 = vsel %vm569, %v319, 0
      %v574 = vsel %vm569, %v320, 0
      %v577 = vsel %vm569, %v321, 0
      %v580 = vsel %vm569, %v322, 0
      %v583 = vsel %vm569, %v323, 0
      %v586 = vsel %vm569, %v324, 0
      %v589 = vsel %vm569, %v325, 0
      %v592 = vsel %vm569, %v326, 0
      %v595 = vsel %vm569, %v327, 0
      %v598 = vsel %vm569, %v328, 0
      %v601 = vsel %vm569, %v329, 0
      %v604 = vsel %vm569, %v330, 0
      %v607 = vsel %vm569, %v331, 0
      %v610 = vsel %vm569, %v332, 0
      %v613 = vsel %vm569, %v333, 0
      %v616 = vsel %vm569, %v334, 0
      %618 = vmatpush.bf16.msra.mxu0 0
      %619 = vmatpush.bf16.msra.mxu0 0
      %620 = vmatpush.bf16.msra.mxu0 0
      %621 = vmatpush.bf16.msra.mxu0 0
      %622 = vmatpush.bf16.msra.mxu0 %v564
      %623 = vmatpush.bf16.msra.mxu0 %v563
      %624 = vmatpush.bf16.msra.mxu0 %v562
      %625 = vmatpush.bf16.msra.mxu0 %v561
      %626 = vmatmul.bf16.gmra.mxu0 %v571
      %v627 = vpop.f32.mrf.mxu0
      %v628 = vadd.f32 %v466, %v627
      %v629 = vpop.f32.mrf.mxu0
      %v630 = vadd.f32 %v468, %v629
      %631 = vmatmul.bf16.gmra.mxu0 %v574
      %v632 = vpop.f32.mrf.mxu0
      %v633 = vadd.f32 %v471, %v632
      %v634 = vpop.f32.mrf.mxu0
      %v635 = vadd.f32 %v473, %v634
      %636 = vmatmul.bf16.gmra.mxu0 %v577
      %v637 = vpop.f32.mrf.mxu0
      %v638 = vadd.f32 %v476, %v637
      %v639 = vpop.f32.mrf.mxu0
      %v640 = vadd.f32 %v478, %v639
      %641 = vmatmul.bf16.gmra.mxu0 %v580
      %v642 = vpop.f32.mrf.mxu0
      %v643 = vadd.f32 %v481, %v642
      %v644 = vpop.f32.mrf.mxu0
      %v645 = vadd.f32 %v483, %v644
      %646 = vmatmul.bf16.gmra.mxu0 %v583
      %v647 = vpop.f32.mrf.mxu0
      %v648 = vadd.f32 %v486, %v647
      %v649 = vpop.f32.mrf.mxu0
      %v650 = vadd.f32 %v488, %v649
      %651 = vmatmul.bf16.gmra.mxu0 %v586
      %v652 = vpop.f32.mrf.mxu0
      %v653 = vadd.f32 %v491, %v652
      %v654 = vpop.f32.mrf.mxu0
      %v655 = vadd.f32 %v493, %v654
      %656 = vmatmul.bf16.gmra.mxu0 %v589
      %v657 = vpop.f32.mrf.mxu0
      %v658 = vadd.f32 %v496, %v657
      %v659 = vpop.f32.mrf.mxu0
      %v660 = vadd.f32 %v498, %v659
      %661 = vmatmul.bf16.gmra.mxu0 %v592
      %v662 = vpop.f32.mrf.mxu0
      %v663 = vadd.f32 %v501, %v662
      %v664 = vpop.f32.mrf.mxu0
      %v665 = vadd.f32 %v503, %v664
      %666 = vmatmul.bf16.gmra.mxu0 %v595
      %v667 = vpop.f32.mrf.mxu0
      %v668 = vadd.f32 %v506, %v667
      %v669 = vpop.f32.mrf.mxu0
      %v670 = vadd.f32 %v508, %v669
      %671 = vmatmul.bf16.gmra.mxu0 %v598
      %v672 = vpop.f32.mrf.mxu0
      %v673 = vadd.f32 %v511, %v672
      %v674 = vpop.f32.mrf.mxu0
      %v675 = vadd.f32 %v513, %v674
      %676 = vmatmul.bf16.gmra.mxu0 %v601
      %v677 = vpop.f32.mrf.mxu0
      %v678 = vadd.f32 %v516, %v677
      %v679 = vpop.f32.mrf.mxu0
      %v680 = vadd.f32 %v518, %v679
      %681 = vmatmul.bf16.gmra.mxu0 %v604
      %v682 = vpop.f32.mrf.mxu0
      %v683 = vadd.f32 %v521, %v682
      %v684 = vpop.f32.mrf.mxu0
      %v685 = vadd.f32 %v523, %v684
      %686 = vmatmul.bf16.gmra.mxu0 %v607
      %v687 = vpop.f32.mrf.mxu0
      %v688 = vadd.f32 %v526, %v687
      %v689 = vpop.f32.mrf.mxu0
      %v690 = vadd.f32 %v528, %v689
      %691 = vmatmul.bf16.gmra.mxu0 %v610
      %v692 = vpop.f32.mrf.mxu0
      %v693 = vadd.f32 %v531, %v692
      %v694 = vpop.f32.mrf.mxu0
      %v695 = vadd.f32 %v533, %v694
      %696 = vmatmul.bf16.gmra.mxu0 %v613
      %v697 = vpop.f32.mrf.mxu0
      %v698 = vadd.f32 %v536, %v697
      %v699 = vpop.f32.mrf.mxu0
      %v700 = vadd.f32 %v538, %v699
      %701 = vmatmul.bf16.gmra.mxu0 %v616
      %v702 = vpop.f32.mrf.mxu0
      %v703 = vadd.f32 %v541, %v702
      %v704 = vpop.f32.mrf.mxu0
      %v705 = vadd.f32 %v543, %v704
      %706 = vdwg.mxu0
      %v708 = vperm.slane %v278, 0
      %v710 = vadd.f32 %v628, %v708
      %v711 = vadd.f32 %v630, %v708
      %v712 = vadd.f32 %v633, %v708
      %v713 = vadd.f32 %v635, %v708
      %v714 = vadd.f32 %v638, %v708
      %v715 = vadd.f32 %v640, %v708
      %v716 = vadd.f32 %v643, %v708
      %v717 = vadd.f32 %v645, %v708
      %v718 = vadd.f32 %v648, %v708
      %v719 = vadd.f32 %v650, %v708
      %v720 = vadd.f32 %v653, %v708
      %v721 = vadd.f32 %v655, %v708
      %v722 = vadd.f32 %v658, %v708
      %v723 = vadd.f32 %v660, %v708
      %v724 = vadd.f32 %v663, %v708
      %v725 = vadd.f32 %v665, %v708
      %v726 = vadd.f32 %v668, %v708
      %v727 = vadd.f32 %v670, %v708
      %v728 = vadd.f32 %v673, %v708
      %v729 = vadd.f32 %v675, %v708
      %v730 = vadd.f32 %v678, %v708
      %v731 = vadd.f32 %v680, %v708
      %v732 = vadd.f32 %v683, %v708
      %v733 = vadd.f32 %v685, %v708
      %v734 = vadd.f32 %v688, %v708
      %v735 = vadd.f32 %v690, %v708
      %v736 = vadd.f32 %v693, %v708
      %v737 = vadd.f32 %v695, %v708
      %v738 = vadd.f32 %v698, %v708
      %v739 = vadd.f32 %v700, %v708
      %v740 = vadd.f32 %v703, %v708
      %v741 = vadd.f32 %v705, %v708
      %v742 = vmax.f32 %v710, 0.0
      %v743 = vmax.f32 %v711, 0.0
      %v744 = vmax.f32 %v712, 0.0
      %v745 = vmax.f32 %v713, 0.0
      %v746 = vmax.f32 %v714, 0.0
      %v747 = vmax.f32 %v715, 0.0
      %v748 = vmax.f32 %v716, 0.0
      %v749 = vmax.f32 %v717, 0.0
      %v750 = vmax.f32 %v718, 0.0
      %v751 = vmax.f32 %v719, 0.0
      %v752 = vmax.f32 %v720, 0.0
      %v753 = vmax.f32 %v721, 0.0
      %v754 = vmax.f32 %v722, 0.0
      %v755 = vmax.f32 %v723, 0.0
      %v756 = vmax.f32 %v724, 0.0
      %v757 = vmax.f32 %v725, 0.0
      %v758 = vmax.f32 %v726, 0.0
      %v759 = vmax.f32 %v727, 0.0
      %v760 = vmax.f32 %v728, 0.0
      %v761 = vmax.f32 %v729, 0.0
      %v762 = vmax.f32 %v730, 0.0
      %v763 = vmax.f32 %v731, 0.0
      %v764 = vmax.f32 %v732, 0.0
      %v765 = vmax.f32 %v733, 0.0
      %v766 = vmax.f32 %v734, 0.0
      %v767 = vmax.f32 %v735, 0.0
      %v768 = vmax.f32 %v736, 0.0
      %v769 = vmax.f32 %v737, 0.0
      %v770 = vmax.f32 %v738, 0.0
      %v771 = vmax.f32 %v739, 0.0
      %v772 = vmax.f32 %v740, 0.0
      %v773 = vmax.f32 %v741, 0.0
      %v774 = vpack.c.bf16 %v743, %v742
      %v775 = vpack.c.bf16 %v745, %v744
      %v776 = vpack.c.bf16 %v747, %v746
      %v777 = vpack.c.bf16 %v749, %v748
      %v778 = vpack.c.bf16 %v751, %v750
      %v779 = vpack.c.bf16 %v753, %v752
      %v780 = vpack.c.bf16 %v755, %v754
      %v781 = vpack.c.bf16 %v757, %v756
      %v782 = vpack.c.bf16 %v759, %v758
      %v783 = vpack.c.bf16 %v761, %v760
      %v784 = vpack.c.bf16 %v763, %v762
      %v785 = vpack.c.bf16 %v765, %v764
      %v786 = vpack.c.bf16 %v767, %v766
      %v787 = vpack.c.bf16 %v769, %v768
      %v788 = vpack.c.bf16 %v771, %v770
      %v789 = vpack.c.bf16 %v773, %v772
      %v798 = vunpack.c.l.b16 %v279
      %v799 = vunpack.c.l.b16 %v280
      %v800 = vunpack.c.l.b16 %v281
      %v801 = vunpack.c.l.b16 %v282
      %v802 = vunpack.c.l.b16 %v283
      %v803 = vunpack.c.l.b16 %v284
      %v804 = vunpack.c.l.b16 %v285
      %v805 = vunpack.c.l.b16 %v286
      %v806 = vpack.c.b16 %v799, %v798
      %v807 = vpack.c.b16 %v801, %v800
      %v808 = vpack.c.b16 %v803, %v802
      %v809 = vpack.c.b16 %v805, %v804
      %814 = vrot.lane.b32.xlu0 %v708, 64
      %v815 = vpop.permute.xlu0 %814
      %v818 = vsel %vm569, %v774, 0
      %v821 = vsel %vm569, %v775, 0
      %v824 = vsel %vm569, %v776, 0
      %v827 = vsel %vm569, %v777, 0
      %v830 = vsel %vm569, %v778, 0
      %v833 = vsel %vm569, %v779, 0
      %v836 = vsel %vm569, %v780, 0
      %v839 = vsel %vm569, %v781, 0
      %v842 = vsel %vm569, %v782, 0
      %v845 = vsel %vm569, %v783, 0
      %v848 = vsel %vm569, %v784, 0
      %v851 = vsel %vm569, %v785, 0
      %v854 = vsel %vm569, %v786, 0
      %v857 = vsel %vm569, %v787, 0
      %v860 = vsel %vm569, %v788, 0
      %v863 = vsel %vm569, %v789, 0
      %865 = vmatpush.bf16.msra.mxu0 0
      %866 = vmatpush.bf16.msra.mxu0 0
      %867 = vmatpush.bf16.msra.mxu0 0
      %868 = vmatpush.bf16.msra.mxu0 0
      %869 = vmatpush.bf16.msra.mxu0 %v809
      %870 = vmatpush.bf16.msra.mxu0 %v808
      %871 = vmatpush.bf16.msra.mxu0 %v807
      %872 = vmatpush.bf16.msra.mxu0 %v806
      %873 = vmatmul.bf16.gmra.mxu0 %v818
      %v874 = vpop.f32.mrf.mxu0
      %v875 = vadd.f32 %v815, %v874
      %v876 = vpop.f32.mrf.mxu0
      %v877 = vadd.f32 %v815, %v876
      %878 = vmatmul.bf16.gmra.mxu0 %v821
      %v879 = vpop.f32.mrf.mxu0
      %v880 = vadd.f32 %v815, %v879
      %v881 = vpop.f32.mrf.mxu0
      %v882 = vadd.f32 %v815, %v881
      %883 = vmatmul.bf16.gmra.mxu0 %v824
      %v884 = vpop.f32.mrf.mxu0
      %v885 = vadd.f32 %v815, %v884
      %v886 = vpop.f32.mrf.mxu0
      %v887 = vadd.f32 %v815, %v886
      %888 = vmatmul.bf16.gmra.mxu0 %v827
      %v889 = vpop.f32.mrf.mxu0
      %v890 = vadd.f32 %v815, %v889
      %v891 = vpop.f32.mrf.mxu0
      %v892 = vadd.f32 %v815, %v891
      %893 = vmatmul.bf16.gmra.mxu0 %v830
      %v894 = vpop.f32.mrf.mxu0
      %v895 = vadd.f32 %v815, %v894
      %v896 = vpop.f32.mrf.mxu0
      %v897 = vadd.f32 %v815, %v896
      %898 = vmatmul.bf16.gmra.mxu0 %v833
      %v899 = vpop.f32.mrf.mxu0
      %v900 = vadd.f32 %v815, %v899
      %v901 = vpop.f32.mrf.mxu0
      %v902 = vadd.f32 %v815, %v901
      %903 = vmatmul.bf16.gmra.mxu0 %v836
      %v904 = vpop.f32.mrf.mxu0
      %v905 = vadd.f32 %v815, %v904
      %v906 = vpop.f32.mrf.mxu0
      %v907 = vadd.f32 %v815, %v906
      %908 = vmatmul.bf16.gmra.mxu0 %v839
      %v909 = vpop.f32.mrf.mxu0
      %v910 = vadd.f32 %v815, %v909
      %v911 = vpop.f32.mrf.mxu0
      %v912 = vadd.f32 %v815, %v911
      %913 = vmatmul.bf16.gmra.mxu0 %v842
      %v914 = vpop.f32.mrf.mxu0
      %v915 = vadd.f32 %v815, %v914
      %v916 = vpop.f32.mrf.mxu0
      %v917 = vadd.f32 %v815, %v916
      %918 = vmatmul.bf16.gmra.mxu0 %v845
      %v919 = vpop.f32.mrf.mxu0
      %v920 = vadd.f32 %v815, %v919
      %v921 = vpop.f32.mrf.mxu0
      %v922 = vadd.f32 %v815, %v921
      %923 = vmatmul.bf16.gmra.mxu0 %v848
      %v924 = vpop.f32.mrf.mxu0
      %v925 = vadd.f32 %v815, %v924
      %v926 = vpop.f32.mrf.mxu0
      %v927 = vadd.f32 %v815, %v926
      %928 = vmatmul.bf16.gmra.mxu0 %v851
      %v929 = vpop.f32.mrf.mxu0
      %v930 = vadd.f32 %v815, %v929
      %v931 = vpop.f32.mrf.mxu0
      %v932 = vadd.f32 %v815, %v931
      %933 = vmatmul.bf16.gmra.mxu0 %v854
      %v934 = vpop.f32.mrf.mxu0
      %v935 = vadd.f32 %v815, %v934
      %v936 = vpop.f32.mrf.mxu0
      %v937 = vadd.f32 %v815, %v936
      %938 = vmatmul.bf16.gmra.mxu0 %v857
      %v939 = vpop.f32.mrf.mxu0
      %v940 = vadd.f32 %v815, %v939
      %v941 = vpop.f32.mrf.mxu0
      %v942 = vadd.f32 %v815, %v941
      %943 = vmatmul.bf16.gmra.mxu0 %v860
      %v944 = vpop.f32.mrf.mxu0
      %v945 = vadd.f32 %v815, %v944
      %v946 = vpop.f32.mrf.mxu0
      %v947 = vadd.f32 %v815, %v946
      %948 = vmatmul.bf16.gmra.mxu0 %v863
      %v949 = vpop.f32.mrf.mxu0
      %v950 = vadd.f32 %v815, %v949
      %v951 = vpop.f32.mrf.mxu0
      %v952 = vadd.f32 %v815, %v951
      %953 = vdwg.mxu0
      %v954 = vmax.f32 %v875, 0.0
      %v955 = vmax.f32 %v877, 0.0
      %v956 = vmax.f32 %v880, 0.0
      %v957 = vmax.f32 %v882, 0.0
      %v958 = vmax.f32 %v885, 0.0
      %v959 = vmax.f32 %v887, 0.0
      %v960 = vmax.f32 %v890, 0.0
      %v961 = vmax.f32 %v892, 0.0
      %v962 = vmax.f32 %v895, 0.0
      %v963 = vmax.f32 %v897, 0.0
      %v964 = vmax.f32 %v900, 0.0
      %v965 = vmax.f32 %v902, 0.0
      %v966 = vmax.f32 %v905, 0.0
      %v967 = vmax.f32 %v907, 0.0
      %v968 = vmax.f32 %v910, 0.0
      %v969 = vmax.f32 %v912, 0.0
      %v970 = vmax.f32 %v915, 0.0
      %v971 = vmax.f32 %v917, 0.0
      %v972 = vmax.f32 %v920, 0.0
      %v973 = vmax.f32 %v922, 0.0
      %v974 = vmax.f32 %v925, 0.0
      %v975 = vmax.f32 %v927, 0.0
      %v976 = vmax.f32 %v930, 0.0
      %v977 = vmax.f32 %v932, 0.0
      %v978 = vmax.f32 %v935, 0.0
      %v979 = vmax.f32 %v937, 0.0
      %v980 = vmax.f32 %v940, 0.0
      %v981 = vmax.f32 %v942, 0.0
      %v982 = vmax.f32 %v945, 0.0
      %v983 = vmax.f32 %v947, 0.0
      %v984 = vmax.f32 %v950, 0.0
      %v985 = vmax.f32 %v952, 0.0
      %v986 = vpack.c.bf16 %v955, %v954
      %v987 = vpack.c.bf16 %v957, %v956
      %v988 = vpack.c.bf16 %v959, %v958
      %v989 = vpack.c.bf16 %v961, %v960
      %v990 = vpack.c.bf16 %v963, %v962
      %v991 = vpack.c.bf16 %v965, %v964
      %v992 = vpack.c.bf16 %v967, %v966
      %v993 = vpack.c.bf16 %v969, %v968
      %v994 = vpack.c.bf16 %v971, %v970
      %v995 = vpack.c.bf16 %v973, %v972
      %v996 = vpack.c.bf16 %v975, %v974
      %v997 = vpack.c.bf16 %v977, %v976
      %v998 = vpack.c.bf16 %v979, %v978
      %v999 = vpack.c.bf16 %v981, %v980
      %v1000 = vpack.c.bf16 %v983, %v982
      %v1001 = vpack.c.bf16 %v985, %v984
      %1002 = vrot.lane.b32.xlu0 %v806, 96
      %v1003 = vpop.permute.xlu0 %1002
      %1004 = vrot.lane.b32.xlu0 %v807, 96
      %v1005 = vpop.permute.xlu0 %1004
      %1008 = vrot.lane.b32.xlu0 %v708, 32
      %v1009 = vpop.permute.xlu0 %1008
      %v1012 = vsel %vm407, %v986, 0
      %v1015 = vsel %vm407, %v987, 0
      %v1018 = vsel %vm407, %v988, 0
      %v1021 = vsel %vm407, %v989, 0
      %v1024 = vsel %vm407, %v990, 0
      %v1027 = vsel %vm407, %v991, 0
      %v1030 = vsel %vm407, %v992, 0
      %v1033 = vsel %vm407, %v993, 0
      %v1036 = vsel %vm407, %v994, 0
      %v1039 = vsel %vm407, %v995, 0
      %v1042 = vsel %vm407, %v996, 0
      %v1045 = vsel %vm407, %v997, 0
      %v1048 = vsel %vm407, %v998, 0
      %v1051 = vsel %vm407, %v999, 0
      %v1054 = vsel %vm407, %v1000, 0
      %v1057 = vsel %vm407, %v1001, 0
      %1059 = vmatpush.bf16.msra.mxu0 0
      %1060 = vmatpush.bf16.msra.mxu0 0
      %1061 = vmatpush.bf16.msra.mxu0 0
      %1062 = vmatpush.bf16.msra.mxu0 0
      %1063 = vmatpush.bf16.msra.mxu0 0
      %1064 = vmatpush.bf16.msra.mxu0 0
      %1065 = vmatpush.bf16.msra.mxu0 %v1005
      %1066 = vmatpush.bf16.msra.mxu0 %v1003
      %1067 = vmatmul.bf16.gmra.mxu0 %v1012
      %v1068 = vpop.f32.mrf.mxu0
      %v1069 = vadd.f32 %v1009, %v1068
      %v1070 = vpop.f32.mrf.mxu0
      %v1071 = vadd.f32 %v1009, %v1070
      %1072 = vmatmul.bf16.gmra.mxu0 %v1015
      %v1073 = vpop.f32.mrf.mxu0
      %v1074 = vadd.f32 %v1009, %v1073
      %v1075 = vpop.f32.mrf.mxu0
      %v1076 = vadd.f32 %v1009, %v1075
      %1077 = vmatmul.bf16.gmra.mxu0 %v1018
      %v1078 = vpop.f32.mrf.mxu0
      %v1079 = vadd.f32 %v1009, %v1078
      %v1080 = vpop.f32.mrf.mxu0
      %v1081 = vadd.f32 %v1009, %v1080
      %1082 = vmatmul.bf16.gmra.mxu0 %v1021
      %v1083 = vpop.f32.mrf.mxu0
      %v1084 = vadd.f32 %v1009, %v1083
      %v1085 = vpop.f32.mrf.mxu0
      %v1086 = vadd.f32 %v1009, %v1085
      %1087 = vmatmul.bf16.gmra.mxu0 %v1024
      %v1088 = vpop.f32.mrf.mxu0
      %v1089 = vadd.f32 %v1009, %v1088
      %v1090 = vpop.f32.mrf.mxu0
      %v1091 = vadd.f32 %v1009, %v1090
      %1092 = vmatmul.bf16.gmra.mxu0 %v1027
      %v1093 = vpop.f32.mrf.mxu0
      %v1094 = vadd.f32 %v1009, %v1093
      %v1095 = vpop.f32.mrf.mxu0
      %v1096 = vadd.f32 %v1009, %v1095
      %1097 = vmatmul.bf16.gmra.mxu0 %v1030
      %v1098 = vpop.f32.mrf.mxu0
      %v1099 = vadd.f32 %v1009, %v1098
      %v1100 = vpop.f32.mrf.mxu0
      %v1101 = vadd.f32 %v1009, %v1100
      %1102 = vmatmul.bf16.gmra.mxu0 %v1033
      %v1103 = vpop.f32.mrf.mxu0
      %v1104 = vadd.f32 %v1009, %v1103
      %v1105 = vpop.f32.mrf.mxu0
      %v1106 = vadd.f32 %v1009, %v1105
      %1107 = vmatmul.bf16.gmra.mxu0 %v1036
      %v1108 = vpop.f32.mrf.mxu0
      %v1109 = vadd.f32 %v1009, %v1108
      %v1110 = vpop.f32.mrf.mxu0
      %v1111 = vadd.f32 %v1009, %v1110
      %1112 = vmatmul.bf16.gmra.mxu0 %v1039
      %v1113 = vpop.f32.mrf.mxu0
      %v1114 = vadd.f32 %v1009, %v1113
      %v1115 = vpop.f32.mrf.mxu0
      %v1116 = vadd.f32 %v1009, %v1115
      %1117 = vmatmul.bf16.gmra.mxu0 %v1042
      %v1118 = vpop.f32.mrf.mxu0
      %v1119 = vadd.f32 %v1009, %v1118
      %v1120 = vpop.f32.mrf.mxu0
      %v1121 = vadd.f32 %v1009, %v1120
      %1122 = vmatmul.bf16.gmra.mxu0 %v1045
      %v1123 = vpop.f32.mrf.mxu0
      %v1124 = vadd.f32 %v1009, %v1123
      %v1125 = vpop.f32.mrf.mxu0
      %v1126 = vadd.f32 %v1009, %v1125
      %1127 = vmatmul.bf16.gmra.mxu0 %v1048
      %v1128 = vpop.f32.mrf.mxu0
      %v1129 = vadd.f32 %v1009, %v1128
      %v1130 = vpop.f32.mrf.mxu0
      %v1131 = vadd.f32 %v1009, %v1130
      %1132 = vmatmul.bf16.gmra.mxu0 %v1051
      %v1133 = vpop.f32.mrf.mxu0
      %v1134 = vadd.f32 %v1009, %v1133
      %v1135 = vpop.f32.mrf.mxu0
      %v1136 = vadd.f32 %v1009, %v1135
      %1137 = vmatmul.bf16.gmra.mxu0 %v1054
      %v1138 = vpop.f32.mrf.mxu0
      %v1139 = vadd.f32 %v1009, %v1138
      %v1140 = vpop.f32.mrf.mxu0
      %v1141 = vadd.f32 %v1009, %v1140
      %1142 = vmatmul.bf16.gmra.mxu0 %v1057
      %v1143 = vpop.f32.mrf.mxu0
      %v1144 = vadd.f32 %v1009, %v1143
      %v1145 = vpop.f32.mrf.mxu0
      %v1146 = vadd.f32 %v1009, %v1145
      %1147 = vdwg.mxu0
      %v1148 = vmax.f32 %v1069, 0.0
      %v1149 = vmax.f32 %v1071, 0.0
      %v1150 = vmax.f32 %v1074, 0.0
      %v1151 = vmax.f32 %v1076, 0.0
      %v1152 = vmax.f32 %v1079, 0.0
      %v1153 = vmax.f32 %v1081, 0.0
      %v1154 = vmax.f32 %v1084, 0.0
      %v1155 = vmax.f32 %v1086, 0.0
      %v1156 = vmax.f32 %v1089, 0.0
      %v1157 = vmax.f32 %v1091, 0.0
      %v1158 = vmax.f32 %v1094, 0.0
      %v1159 = vmax.f32 %v1096, 0.0
      %v1160 = vmax.f32 %v1099, 0.0
      %v1161 = vmax.f32 %v1101, 0.0
      %v1162 = vmax.f32 %v1104, 0.0
      %v1163 = vmax.f32 %v1106, 0.0
      %v1164 = vmax.f32 %v1109, 0.0
      %v1165 = vmax.f32 %v1111, 0.0
      %v1166 = vmax.f32 %v1114, 0.0
      %v1167 = vmax.f32 %v1116, 0.0
      %v1168 = vmax.f32 %v1119, 0.0
      %v1169 = vmax.f32 %v1121, 0.0
      %v1170 = vmax.f32 %v1124, 0.0
      %v1171 = vmax.f32 %v1126, 0.0
      %v1172 = vmax.f32 %v1129, 0.0
      %v1173 = vmax.f32 %v1131, 0.0
      %v1174 = vmax.f32 %v1134, 0.0
      %v1175 = vmax.f32 %v1136, 0.0
      %v1176 = vmax.f32 %v1139, 0.0
      %v1177 = vmax.f32 %v1141, 0.0
      %v1178 = vmax.f32 %v1144, 0.0
      %v1179 = vmax.f32 %v1146, 0.0
      %v1180 = vpack.c.bf16 %v1149, %v1148
      %v1181 = vpack.c.bf16 %v1151, %v1150
      %v1182 = vpack.c.bf16 %v1153, %v1152
      %v1183 = vpack.c.bf16 %v1155, %v1154
      %v1184 = vpack.c.bf16 %v1157, %v1156
      %v1185 = vpack.c.bf16 %v1159, %v1158
      %v1186 = vpack.c.bf16 %v1161, %v1160
      %v1187 = vpack.c.bf16 %v1163, %v1162
      %v1188 = vpack.c.bf16 %v1165, %v1164
      %v1189 = vpack.c.bf16 %v1167, %v1166
      %v1190 = vpack.c.bf16 %v1169, %v1168
      %v1191 = vpack.c.bf16 %v1171, %v1170
      %v1192 = vpack.c.bf16 %v1173, %v1172
      %v1193 = vpack.c.bf16 %v1175, %v1174
      %v1194 = vpack.c.bf16 %v1177, %v1176
      %v1195 = vpack.c.bf16 %v1179, %v1178
      %1196 = vrot.lane.b32.xlu0 %v806, 80
      %v1197 = vpop.permute.xlu0 %1196
      %1199 = vrot.lane.b32.xlu0 %v708, 16
      %v1200 = vpop.permute.xlu0 %1199
      %vm1202 = vcmask 130048
      %v1204 = vsel %vm1202, %v1180, 0
      %v1207 = vsel %vm1202, %v1181, 0
      %v1210 = vsel %vm1202, %v1182, 0
      %v1213 = vsel %vm1202, %v1183, 0
      %v1216 = vsel %vm1202, %v1184, 0
      %v1219 = vsel %vm1202, %v1185, 0
      %v1222 = vsel %vm1202, %v1186, 0
      %v1225 = vsel %vm1202, %v1187, 0
      %v1228 = vsel %vm1202, %v1188, 0
      %v1231 = vsel %vm1202, %v1189, 0
      %v1234 = vsel %vm1202, %v1190, 0
      %v1237 = vsel %vm1202, %v1191, 0
      %v1240 = vsel %vm1202, %v1192, 0
      %v1243 = vsel %vm1202, %v1193, 0
      %v1246 = vsel %vm1202, %v1194, 0
      %v1249 = vsel %vm1202, %v1195, 0
      %1251 = vmatpush.bf16.msra.mxu0 0
      %1252 = vmatpush.bf16.msra.mxu0 0
      %1253 = vmatpush.bf16.msra.mxu0 0
      %1254 = vmatpush.bf16.msra.mxu0 0
      %1255 = vmatpush.bf16.msra.mxu0 0
      %1256 = vmatpush.bf16.msra.mxu0 0
      %1257 = vmatpush.bf16.msra.mxu0 0
      %1258 = vmatpush.bf16.msra.mxu0 %v1197
      %1259 = vmatmul.bf16.gmra.mxu0 %v1204
      %v1260 = vpop.f32.mrf.mxu0
      %v1261 = vadd.f32 %v1200, %v1260
      %v1262 = vpop.f32.mrf.mxu0
      %v1263 = vadd.f32 %v1200, %v1262
      %1264 = vmatmul.bf16.gmra.mxu0 %v1207
      %v1265 = vpop.f32.mrf.mxu0
      %v1266 = vadd.f32 %v1200, %v1265
      %v1267 = vpop.f32.mrf.mxu0
      %v1268 = vadd.f32 %v1200, %v1267
      %1269 = vmatmul.bf16.gmra.mxu0 %v1210
      %v1270 = vpop.f32.mrf.mxu0
      %v1271 = vadd.f32 %v1200, %v1270
      %v1272 = vpop.f32.mrf.mxu0
      %v1273 = vadd.f32 %v1200, %v1272
      %1274 = vmatmul.bf16.gmra.mxu0 %v1213
      %v1275 = vpop.f32.mrf.mxu0
      %v1276 = vadd.f32 %v1200, %v1275
      %v1277 = vpop.f32.mrf.mxu0
      %v1278 = vadd.f32 %v1200, %v1277
      %1279 = vmatmul.bf16.gmra.mxu0 %v1216
      %v1280 = vpop.f32.mrf.mxu0
      %v1281 = vadd.f32 %v1200, %v1280
      %v1282 = vpop.f32.mrf.mxu0
      %v1283 = vadd.f32 %v1200, %v1282
      %1284 = vmatmul.bf16.gmra.mxu0 %v1219
      %v1285 = vpop.f32.mrf.mxu0
      %v1286 = vadd.f32 %v1200, %v1285
      %v1287 = vpop.f32.mrf.mxu0
      %v1288 = vadd.f32 %v1200, %v1287
      %1289 = vmatmul.bf16.gmra.mxu0 %v1222
      %v1290 = vpop.f32.mrf.mxu0
      %v1291 = vadd.f32 %v1200, %v1290
      %v1292 = vpop.f32.mrf.mxu0
      %v1293 = vadd.f32 %v1200, %v1292
      %1294 = vmatmul.bf16.gmra.mxu0 %v1225
      %v1295 = vpop.f32.mrf.mxu0
      %v1296 = vadd.f32 %v1200, %v1295
      %v1297 = vpop.f32.mrf.mxu0
      %v1298 = vadd.f32 %v1200, %v1297
      %1299 = vmatmul.bf16.gmra.mxu0 %v1228
      %v1300 = vpop.f32.mrf.mxu0
      %v1301 = vadd.f32 %v1200, %v1300
      %v1302 = vpop.f32.mrf.mxu0
      %v1303 = vadd.f32 %v1200, %v1302
      %1304 = vmatmul.bf16.gmra.mxu0 %v1231
      %v1305 = vpop.f32.mrf.mxu0
      %v1306 = vadd.f32 %v1200, %v1305
      %v1307 = vpop.f32.mrf.mxu0
      %v1308 = vadd.f32 %v1200, %v1307
      %1309 = vmatmul.bf16.gmra.mxu0 %v1234
      %v1310 = vpop.f32.mrf.mxu0
      %v1311 = vadd.f32 %v1200, %v1310
      %v1312 = vpop.f32.mrf.mxu0
      %v1313 = vadd.f32 %v1200, %v1312
      %1314 = vmatmul.bf16.gmra.mxu0 %v1237
      %v1315 = vpop.f32.mrf.mxu0
      %v1316 = vadd.f32 %v1200, %v1315
      %v1317 = vpop.f32.mrf.mxu0
      %v1318 = vadd.f32 %v1200, %v1317
      %1319 = vmatmul.bf16.gmra.mxu0 %v1240
      %v1320 = vpop.f32.mrf.mxu0
      %v1321 = vadd.f32 %v1200, %v1320
      %v1322 = vpop.f32.mrf.mxu0
      %v1323 = vadd.f32 %v1200, %v1322
      %1324 = vmatmul.bf16.gmra.mxu0 %v1243
      %v1325 = vpop.f32.mrf.mxu0
      %v1326 = vadd.f32 %v1200, %v1325
      %v1327 = vpop.f32.mrf.mxu0
      %v1328 = vadd.f32 %v1200, %v1327
      %1329 = vmatmul.bf16.gmra.mxu0 %v1246
      %v1330 = vpop.f32.mrf.mxu0
      %v1331 = vadd.f32 %v1200, %v1330
      %v1332 = vpop.f32.mrf.mxu0
      %v1333 = vadd.f32 %v1200, %v1332
      %1334 = vmatmul.bf16.gmra.mxu0 %v1249
      %v1335 = vpop.f32.mrf.mxu0
      %v1336 = vadd.f32 %v1200, %v1335
      %v1337 = vpop.f32.mrf.mxu0
      %v1338 = vadd.f32 %v1200, %v1337
      %1339 = vdwg.mxu0
      %vm1340 = vcmask 23552
      %1341 = vst.msk [vmem:[%s275] sm:$0xff] %vm1340, %v1261
      %1342 = vst.msk [vmem:[%s275 + $0x8] sm:$0xff] %vm1340, %v1263
      %1343 = vst.msk [vmem:[%s275 + $0x10] sm:$0xff] %vm1340, %v1266
      %1344 = vst.msk [vmem:[%s275 + $0x18] sm:$0xff] %vm1340, %v1268
      %1345 = vst.msk [vmem:[%s275 + $0x20] sm:$0xff] %vm1340, %v1271
      %1346 = vst.msk [vmem:[%s275 + $0x28] sm:$0xff] %vm1340, %v1273
      %1347 = vst.msk [vmem:[%s275 + $0x30] sm:$0xff] %vm1340, %v1276
      %1348 = vst.msk [vmem:[%s275 + $0x38] sm:$0xff] %vm1340, %v1278
      %1349 = vst.msk [vmem:[%s275 + $0x40] sm:$0xff] %vm1340, %v1281
      %1350 = vst.msk [vmem:[%s275 + $0x48] sm:$0xff] %vm1340, %v1283
      %1351 = vst.msk [vmem:[%s275 + $0x50] sm:$0xff] %vm1340, %v1286
      %1352 = vst.msk [vmem:[%s275 + $0x58] sm:$0xff] %vm1340, %v1288
      %1353 = vst.msk [vmem:[%s275 + $0x60] sm:$0xff] %vm1340, %v1291
      %1354 = vst.msk [vmem:[%s275 + $0x68] sm:$0xff] %vm1340, %v1293
      %1355 = vst.msk [vmem:[%s275 + $0x70] sm:$0xff] %vm1340, %v1296
      %1356 = vst.msk [vmem:[%s275 + $0x78] sm:$0xff] %vm1340, %v1298
      %1357 = vst.msk [vmem:[%s275 + $0x80] sm:$0xff] %vm1340, %v1301
      %1358 = vst.msk [vmem:[%s275 + $0x88] sm:$0xff] %vm1340, %v1303
      %1359 = vst.msk [vmem:[%s275 + $0x90] sm:$0xff] %vm1340, %v1306
      %1360 = vst.msk [vmem:[%s275 + $0x98] sm:$0xff] %vm1340, %v1308
      %1361 = vst.msk [vmem:[%s275 + $0xa0] sm:$0xff] %vm1340, %v1311
      %1362 = vst.msk [vmem:[%s275 + $0xa8] sm:$0xff] %vm1340, %v1313
      %1363 = vst.msk [vmem:[%s275 + $0xb0] sm:$0xff] %vm1340, %v1316
      %1364 = vst.msk [vmem:[%s275 + $0xb8] sm:$0xff] %vm1340, %v1318
      %1365 = vst.msk [vmem:[%s275 + $0xc0] sm:$0xff] %vm1340, %v1321
      %1366 = vst.msk [vmem:[%s275 + $0xc8] sm:$0xff] %vm1340, %v1323
      %1367 = vst.msk [vmem:[%s275 + $0xd0] sm:$0xff] %vm1340, %v1326
      %1368 = vst.msk [vmem:[%s275 + $0xd8] sm:$0xff] %vm1340, %v1328
      %1369 = vst.msk [vmem:[%s275 + $0xe0] sm:$0xff] %vm1340, %v1331
      %1370 = vst.msk [vmem:[%s275 + $0xe8] sm:$0xff] %vm1340, %v1333
      %1371 = vst.msk [vmem:[%s275 + $0xf0] sm:$0xff] %vm1340, %v1336
      %1372 = vst.msk [vmem:[%s275 + $0xf8] sm:$0xff] %vm1340, %v1338
      %s1373 = smul.u32 32, %s17
      %p1374 = scmp.lt.s32.totalorder %s1373, 63
      %s1375 = scalar_select %p1374, %s1373, 63
      %s1376 = smul.addr %s1375, 8
      %s1377 = scalar_lea.vmem %s6, %s1376
      // Predicated region
      $region45: #{tpu_custom_call.1} parent=43 // pred_check
        %p1378 = pneg %p171
      $region46: #{tpu_custom_call.1} parent=43 // pred_check_branch
        %1380 = sbr.rel (%p1378) target = $region48
      $region47: #{tpu_custom_call.1} parent=43 // pred_region
        %s1381 = smul.u32 32, %s17
      $region48: #{tpu_custom_call.1} parent=43 // pred_fallthru
        _
    $region44: #{tpu_custom_call.1} parent=5 // pred_fallthru
      _
    %p1382 = scmp.le.s32.totalorder 2, %s12
    // Predicated region
    $region49: #{tpu_custom_call.1} parent=5 // pred_check
      %p1383 = pneg %p1382
    $region50: #{tpu_custom_call.1} parent=5 // pred_check_branch
      %1385 = sbr.rel (%p1383) target = $region52
    $region51: #{tpu_custom_call.1} parent=5 // pred_region
      %s1386 = ssub.s32 %s12, 2
      // Predicated region
      $region53: #{tpu_custom_call.1} parent=51 // pred_check
        %p1387 = pneg %p177
      $region54: #{tpu_custom_call.1} parent=51 // pred_check_branch
        %1389 = sbr.rel (%p1387) target = $region56
      $region55: #{tpu_custom_call.1} parent=51 // pred_region
        %s1390 = smul.u32 32, %s18
        %p1391 = scmp.lt.s32.totalorder %s1390, 63
        %s1392 = scalar_select %p1391, %s1390, 63
        %s1393 = smul.addr %s1392, 8
        %s1394 = scalar_lea.vmem %s6, %s1393
      $region56: #{tpu_custom_call.1} parent=51 // pred_fallthru
        _
    $region52: #{tpu_custom_call.1} parent=5 // pred_fallthru
      _
  $region6: #{tpu_custom_call.1} parent=0 // loop_footer
    %s16 = sadd.s32 1, %s12
  $region7: #{tpu_custom_call.1} parent=0 // loop_footer_branch
    %11 = sbr.rel target = $region3
  $region8: #{tpu_custom_call.1} parent=0 // loop_exit
    _

</llo_original>
